<compile_context>
chip_gen: v5e
topology: v5e:2x2
jax: 0.10.0
libtpu: 0.0.40
codegen_flags: <defaults>
</compile_context>

<pallas_src>
import jax
import jax.numpy as jnp
from jax.experimental import pallas as pl
from jax.experimental.pallas import tpu as pltpu


def _round_up(x, m):
    return ((x + m - 1) // m) * m


# ----------------------------------------------------------------------------
# Pallas kernel: fused fc1 -> ReLU -> fc2 for one row-tile.
# ----------------------------------------------------------------------------
def mlp_kernel(x_ref, w1_ref, b1_ref, w2_ref, b2_ref, o_ref):
    x = x_ref[...]                                              # (tm, Cin)
    h = jnp.dot(x, w1_ref[...], preferred_element_type=jnp.float32)
    h = jnp.maximum(h + b1_ref[...], 0.0)                       # (tm, Chid) in VMEM
    y = jnp.dot(h, w2_ref[...], preferred_element_type=jnp.float32)
    o_ref[...] = (y + b2_ref[...]).astype(o_ref.dtype)          # (tm, Cout)


# ----------------------------------------------------------------------------
# Wrapper
# ----------------------------------------------------------------------------
def mlp_forward(x, w1, b1, w2, b2, *, tile_m=128):
    """x: (..., in_features). w1: (in, hid), b1: (hid,), w2: (hid, out), b2: (out,)."""
    in_features = x.shape[-1]
    hidden = w1.shape[-1]
    out_features = w2.shape[-1]
    lead_shape = x.shape[:-1]

    x2 = x.reshape(-1, in_features)
    M = x2.shape[0]

    # Row tile: multiple of 8 (sublane), capped at tile_m. Pad rows if needed.
    tm = min(tile_m, _round_up(max(M, 1), 8))
    Mp = _round_up(M, tm)
    if Mp != M:
        x2 = jnp.pad(x2, ((0, Mp - M), (0, 0)))
    grid = (Mp // tm,)

    b1r = b1.reshape(1, hidden)
    b2r = b2.reshape(1, out_features)

    flops = 2 * Mp * (in_features * hidden + hidden * out_features)
    bytes_accessed = 4 * (Mp * in_features + in_features * hidden + hidden
                          + hidden * out_features + out_features
                          + Mp * out_features)

    out = pl.pallas_call(
        mlp_kernel,
        out_shape=jax.ShapeDtypeStruct((Mp, out_features), x.dtype),
        grid=grid,
        in_specs=[
            pl.BlockSpec((tm, in_features), lambda i: (i, 0)),          # x tile
            pl.BlockSpec((in_features, hidden), lambda i: (0, 0)),      # W1 (resident)
            pl.BlockSpec((1, hidden), lambda i: (0, 0)),                # b1
            pl.BlockSpec((hidden, out_features), lambda i: (0, 0)),     # W2 (resident)
            pl.BlockSpec((1, out_features), lambda i: (0, 0)),          # b2
        ],
        out_specs=pl.BlockSpec((tm, out_features), lambda i: (i, 0)),
        compiler_params=pltpu.CompilerParams(
            dimension_semantics=("parallel",)),
        cost_estimate=pl.CostEstimate(
            flops=flops, transcendentals=0, bytes_accessed=bytes_accessed),
    )(x2, w1, b1r, w2, b2r)

    out = out[:M]
    return out.reshape(*lead_shape, out_features)


# ----------------------------------------------------------------------------
if __name__ == "__main__":
    # Small shapes consistent with the module's use in view_transformer_pc:
    # per-sample feature vectors of width 27 mapped to a 32-wide hidden/out.
    B, S = 2, 8
    in_features, hidden_features, out_features = 27, 32, 32

    key = jax.random.PRNGKey(0)
    kx, k1, kb1, k2, kb2 = jax.random.split(key, 5)
    x = jax.random.normal(kx, (B, S, in_features), jnp.float32)
    w1 = (1.0 / in_features) ** 0.5 * jax.random.normal(
        k1, (in_features, hidden_features), jnp.float32)
    b1 = 0.02 * jax.random.normal(kb1, (hidden_features,), jnp.float32)
    w2 = (1.0 / hidden_features) ** 0.5 * jax.random.normal(
        k2, (hidden_features, out_features), jnp.float32)
    b2 = 0.02 * jax.random.normal(kb2, (out_features,), jnp.float32)

    out = mlp_forward(x, w1, b1, w2, b2)
    out = jax.block_until_ready(out)

    # Pure-JAX reference (fc1 -> ReLU -> fc2; dropout is identity).
    ref = jnp.maximum(x @ w1 + b1, 0.0) @ w2 + b2

    assert out.shape == (B, S, out_features), out.shape
    assert bool(jnp.all(jnp.isfinite(out)))
    assert bool(jnp.allclose(out, ref, rtol=1e-5, atol=1e-5)), float(
        jnp.max(jnp.abs(out - ref)))
    print("KERNEL_OK")
</pallas_src>

<mosaic_0001>
module attributes {stable_mosaic.version = 11 : i64} {
  func.func @mlp_kernel(%arg0: i32, %arg1: memref<16x27xf32, #tpu.memory_space<vmem>>, %arg2: memref<27x32xf32, #tpu.memory_space<vmem>>, %arg3: memref<1x32xf32, #tpu.memory_space<vmem>>, %arg4: memref<32x32xf32, #tpu.memory_space<vmem>>, %arg5: memref<1x32xf32, #tpu.memory_space<vmem>>, %arg6: memref<16x32xf32, #tpu.memory_space<vmem>>) attributes {dimension_semantics = [#tpu.dimension_semantics<parallel>], iteration_bounds = array<i64: 1>, scalar_prefetch = 0 : i64, scratch_operands = 0 : i64, tpu.core_type = #tpu.core_type<tc>, window_params = [{transform_indices = @transform_0, window_bounds = array<i64: 16, 27>}, {pipeline_mode = #tpu.pipeline_mode<synchronous>, transform_indices = @transform_1, window_bounds = array<i64: 27, 32>}, {pipeline_mode = #tpu.pipeline_mode<synchronous>, transform_indices = @transform_2, window_bounds = array<i64: 1, 32>}, {pipeline_mode = #tpu.pipeline_mode<synchronous>, transform_indices = @transform_3, window_bounds = array<i64: 32, 32>}, {pipeline_mode = #tpu.pipeline_mode<synchronous>, transform_indices = @transform_4, window_bounds = array<i64: 1, 32>}, {transform_indices = @transform_5, window_bounds = array<i64: 16, 32>}]} {
    %c0 = arith.constant 0 : index
    %c0_0 = arith.constant 0 : index
    %0 = vector.load %arg1[%c0, %c0_0] : memref<16x27xf32, #tpu.memory_space<vmem>>, vector<16x27xf32>
    %c0_1 = arith.constant 0 : index
    %c0_2 = arith.constant 0 : index
    %1 = vector.load %arg2[%c0_1, %c0_2] : memref<27x32xf32, #tpu.memory_space<vmem>>, vector<27x32xf32>
    %cst = arith.constant dense<0.000000e+00> : vector<16x32xf32>
    %2 = tpu.matmul %0, %1, %cst {dimension_numbers = #tpu.dot_dimension_numbers<[1], [0], [0], [1], [0, 0, 1, 1], [], []>} : vector<16x27xf32>, vector<27x32xf32>, vector<16x32xf32> -> vector<16x32xf32>
    %c0_3 = arith.constant 0 : index
    %c0_4 = arith.constant 0 : index
    %3 = vector.load %arg3[%c0_3, %c0_4] : memref<1x32xf32, #tpu.memory_space<vmem>>, vector<1x32xf32>
    %4 = vector.broadcast %3 : vector<1x32xf32> to vector<16x32xf32>
    %5 = arith.addf %2, %4 : vector<16x32xf32>
    %cst_5 = arith.constant 0.000000e+00 : f32
    %6 = vector.broadcast %cst_5 : f32 to vector<16x32xf32>
    %7 = arith.maximumf %5, %6 : vector<16x32xf32>
    %c0_6 = arith.constant 0 : index
    %c0_7 = arith.constant 0 : index
    %8 = vector.load %arg4[%c0_6, %c0_7] : memref<32x32xf32, #tpu.memory_space<vmem>>, vector<32x32xf32>
    %cst_8 = arith.constant dense<0.000000e+00> : vector<16x32xf32>
    %9 = tpu.matmul %7, %8, %cst_8 {dimension_numbers = #tpu.dot_dimension_numbers<[1], [0], [0], [1], [0, 0, 1, 1], [], []>} : vector<16x32xf32>, vector<32x32xf32>, vector<16x32xf32> -> vector<16x32xf32>
    %c0_9 = arith.constant 0 : index
    %c0_10 = arith.constant 0 : index
    %10 = vector.load %arg5[%c0_9, %c0_10] : memref<1x32xf32, #tpu.memory_space<vmem>>, vector<1x32xf32>
    %11 = vector.broadcast %10 : vector<1x32xf32> to vector<16x32xf32>
    %12 = arith.addf %9, %11 : vector<16x32xf32>
    %c0_11 = arith.constant 0 : index
    %c0_12 = arith.constant 0 : index
    %13 = vector.load %arg6[%c0_11, %c0_12] : memref<16x32xf32, #tpu.memory_space<vmem>>, vector<16x32xf32>
    tpu.vector_store %arg6[%c0_11, %c0_12], %12 {strides = array<i32>} : memref<16x32xf32, #tpu.memory_space<vmem>>, vector<16x32xf32>,
    return
  }
  func.func @transform_0(%arg0: i32) -> (i32, i32) {
    %c0_i32 = arith.constant 0 : i32
    %c0_i32_0 = arith.constant 0 : i32
    return %arg0, %c0_i32 : i32, i32
  }
  func.func @transform_1(%arg0: i32) -> (i32, i32) {
    %c0_i32 = arith.constant 0 : i32
    %c0_i32_0 = arith.constant 0 : i32
    %c0_i32_1 = arith.constant 0 : i32
    return %c0_i32, %c0_i32_0 : i32, i32
  }
  func.func @transform_2(%arg0: i32) -> (i32, i32) {
    %c0_i32 = arith.constant 0 : i32
    %c0_i32_0 = arith.constant 0 : i32
    %c0_i32_1 = arith.constant 0 : i32
    return %c0_i32, %c0_i32_0 : i32, i32
  }
  func.func @transform_3(%arg0: i32) -> (i32, i32) {
    %c0_i32 = arith.constant 0 : i32
    %c0_i32_0 = arith.constant 0 : i32
    %c0_i32_1 = arith.constant 0 : i32
    return %c0_i32, %c0_i32_0 : i32, i32
  }
  func.func @transform_4(%arg0: i32) -> (i32, i32) {
    %c0_i32 = arith.constant 0 : i32
    %c0_i32_0 = arith.constant 0 : i32
    %c0_i32_1 = arith.constant 0 : i32
    return %c0_i32, %c0_i32_0 : i32, i32
  }
  func.func @transform_5(%arg0: i32) -> (i32, i32) {
    %c0_i32 = arith.constant 0 : i32
    %c0_i32_0 = arith.constant 0 : i32
    return %arg0, %c0_i32 : i32, i32
  }
}

</mosaic_0001>

<llo_original>
// kernel: tpu_custom_call.1
$region0: #{tpu_custom_call.1}
  #allocation0 [shape = 'u32[]', space=smem, size = 0x4, offset = 0x4, fixed_abs, tag = 'smem constant byte address 0x4 - core index']
  #allocation1 [shape = 'u32[72,128]{1,0:T(1,128)}', space=vmem, size = 0x9000, scoped, tag = 'internal scratch']
  %s0 = inlined_call_operand.hbm [shape: f32[16,27], index: 0, kind: input, shape index: {}]
  %s1 = inlined_call_operand.hbm [shape: f32[27,32], index: 1, kind: input, shape index: {}]
  %s2 = inlined_call_operand.vmem [shape: f32[1,32], index: 2, kind: input, shape index: {}]
  %s3 = inlined_call_operand.hbm [shape: f32[32,32], index: 3, kind: input, shape index: {}]
  %s4 = inlined_call_operand.vmem [shape: f32[1,32], index: 4, kind: input, shape index: {}]
  %s5 = inlined_call_operand.hbm [shape: f32[16,32], index: 5, kind: output, shape index: {}]
  %s6 = sld [smem:[#allocation0]]
  $region42: #{tpu_custom_call.1} parent=0
    _
  %s8 = ssub.s32 1, %s6
  %s9 = scalar_select 0, %s8, %s6
  $region1: #{tpu_custom_call.1} parent=0
    #allocation2 [shape = 'u8[8192]{0}', space=vmem, size = 0x2000, scoped, tag = 'input window, operand 0, single buffered']
    #allocation3 [shape = 's32[1]{0}', space=sflag, size = 0x4, scoped, tag = 'scoped memory for tpu_custom_call.1']
    #allocation4 [shape = 's32[1]{0}', space=sflag, size = 0x4, scoped, tag = 'scoped memory for tpu_custom_call.1']
    #allocation5 [shape = 'u8[16384]{0}', space=vmem, size = 0x4000, scoped, tag = 'input window, operand 1, single buffered']
    #allocation6 [shape = 's32[1]{0}', space=sflag, size = 0x4, scoped, tag = 'scoped memory for tpu_custom_call.1']
    #allocation7 [shape = 'u8[16384]{0}', space=vmem, size = 0x4000, scoped, tag = 'input window, operand 3, single buffered']
    #allocation8 [shape = 'u8[8192]{0}', space=vmem, size = 0x2000, scoped, tag = 'output window, operand 0, single buffered']
    %10 = vsyncpa [#allocation3], 0
    %11 = vsyncpa [#allocation6], 0
    %12 = vsyncpa [#allocation4], 0
    // Predicated region
    $region2: #{tpu_custom_call.1} parent=1 // pred_check
      _
    $region3: #{tpu_custom_call.1} parent=1 // pred_check_branch
      %14 = sbr.rel (0) target = $region5
    $region4: #{tpu_custom_call.1} parent=1 // pred_region
      %16 = vsyncadd [#allocation3], 0
      %s17 = sshll.u32 %s0, 4
      %s18 = int_to_ptr.hbm [resolvable:$true] %s17
      %s19 = sshll.u32 [#allocation2], 4
      %s20 = int_to_ptr.vmem [resolvable:$true] %s19
      %25 = dma.hbm_to_vmem [thread:$0]  %s18, 256, %s20, [#allocation3], 128, 128, 8
    $region5: #{tpu_custom_call.1} parent=1 // pred_fallthru
      _
    // Predicated region
    $region6: #{tpu_custom_call.1} parent=1 // pred_check
      _
    $region7: #{tpu_custom_call.1} parent=1 // pred_check_branch
      %27 = sbr.rel (0) target = $region9
    $region8: #{tpu_custom_call.1} parent=1 // pred_region
      %29 = vsyncadd [#allocation6], 0
      %s30 = sshll.u32 %s1, 4
      %s31 = int_to_ptr.hbm [resolvable:$true] %s30
      %s32 = sshll.u32 [#allocation5], 4
      %s33 = int_to_ptr.vmem [resolvable:$true] %s32
      %38 = dma.hbm_to_vmem [thread:$0]  %s31, 512, %s33, [#allocation6], 128, 128, 8
    $region9: #{tpu_custom_call.1} parent=1 // pred_fallthru
      _
    // Predicated region
    $region10: #{tpu_custom_call.1} parent=1 // pred_check
      _
    $region11: #{tpu_custom_call.1} parent=1 // pred_check_branch
      %40 = sbr.rel (0) target = $region13
    $region12: #{tpu_custom_call.1} parent=1 // pred_region
      _
    $region13: #{tpu_custom_call.1} parent=1 // pred_fallthru
      _
    // Predicated region
    $region14: #{tpu_custom_call.1} parent=1 // pred_check
      _
    $region15: #{tpu_custom_call.1} parent=1 // pred_check_branch
      %42 = sbr.rel (0) target = $region17
    $region16: #{tpu_custom_call.1} parent=1 // pred_region
      %44 = vsyncadd [#allocation6], 0
      %s45 = sshll.u32 %s3, 4
      %s46 = int_to_ptr.hbm [resolvable:$true] %s45
      %s47 = sshll.u32 [#allocation7], 4
      %s48 = int_to_ptr.vmem [resolvable:$true] %s47
      %53 = dma.hbm_to_vmem [thread:$0]  %s46, 512, %s48, [#allocation6], 128, 128, 8
    $region17: #{tpu_custom_call.1} parent=1 // pred_fallthru
      _
    // Predicated region
    $region18: #{tpu_custom_call.1} parent=1 // pred_check
      _
    $region19: #{tpu_custom_call.1} parent=1 // pred_check_branch
      %55 = sbr.rel (0) target = $region21
    $region20: #{tpu_custom_call.1} parent=1 // pred_region
      _
    $region21: #{tpu_custom_call.1} parent=1 // pred_fallthru
      _
    // Predicated region
    $region22: #{tpu_custom_call.1} parent=1 // pred_check
      _
    $region23: #{tpu_custom_call.1} parent=1 // pred_check_branch
      %57 = sbr.rel (0) target = $region25
    $region24: #{tpu_custom_call.1} parent=1 // pred_region
      %59 = dma.done [#allocation3], 256
    $region25: #{tpu_custom_call.1} parent=1 // pred_fallthru
      _
    // Predicated region
    $region26: #{tpu_custom_call.1} parent=1 // pred_check
      _
    $region27: #{tpu_custom_call.1} parent=1 // pred_check_branch
      %61 = sbr.rel (0) target = $region29
    $region28: #{tpu_custom_call.1} parent=1 // pred_region
      %63 = dma.done [#allocation6], 512
    $region29: #{tpu_custom_call.1} parent=1 // pred_fallthru
      _
    // Predicated region
    $region30: #{tpu_custom_call.1} parent=1 // pred_check
      _
    $region31: #{tpu_custom_call.1} parent=1 // pred_check_branch
      %65 = sbr.rel (0) target = $region33
    $region32: #{tpu_custom_call.1} parent=1 // pred_region
      %67 = dma.done [#allocation6], 512
    $region33: #{tpu_custom_call.1} parent=1 // pred_fallthru
      _
    %v68 = vld [vmem:[#allocation2] sm:$0xff]
    %v69 = vld [vmem:[#allocation2 + $0x8] sm:$0xff]
    %v70 = vld [vmem:[#allocation5] sm:$0xff]
    %v71 = vld [vmem:[#allocation5 + $0x8] sm:$0xff]
    %v72 = vld [vmem:[#allocation5 + $0x10] sm:$0xff]
    %v73 = vld [vmem:[#allocation5 + $0x18] sm:$0x7]
    %v74 = vld [vmem:[%s2] sm:$0x1]
    %v76 = vperm.slane %v74, 0
    %vm78 = vcmask 220160
    %v80 = vsel %vm78, %v68, 0
    %v83 = vsel %vm78, %v69, 0
    %vm85 = vcmask 1042432
    %v87 = vsel %vm85, %v73, 0
    %89 = vmatpush.msra.mxu0 0.0
    %90 = vmatpush.msra.mxu0 0.0
    %91 = vmatpush.msra.mxu0 0.0
    %92 = vmatpush.msra.mxu0 0.0
    %93 = vmatpush.msra.mxu0 0.0
    %94 = vmatpush.msra.mxu0 0.0
    %95 = vmatpush.msra.mxu0 0.0
    %96 = vmatpush.msra.mxu0 0.0
    %97 = vmatpush.msra.mxu0 0.0
    %98 = vmatpush.msra.mxu0 0.0
    %99 = vmatpush.msra.mxu0 0.0
    %100 = vmatpush.msra.mxu0 0.0
    %101 = vmatpush.msra.mxu0 %v87
    %102 = vmatpush.msra.mxu0 %v72
    %103 = vmatpush.msra.mxu0 %v71
    %104 = vmatpush.msra.mxu0 %v70
    %105 = vmatmul.f32.gmra.mxu0 %v80
    %v106 = vpop.f32.mrf.mxu0
    %v107 = vadd.f32 %v76, %v106
    %108 = vmatmul.f32.gmra.mxu0 %v83
    %v109 = vpop.f32.mrf.mxu0
    %v110 = vadd.f32 %v76, %v109
    %111 = vdwg.mxu0
    %v112 = vmax.f32 %v107, 0.0
    %v113 = vmax.f32 %v110, 0.0
    %v114 = vld [vmem:[#allocation7] sm:$0xff]
    %v115 = vld [vmem:[#allocation7 + $0x8] sm:$0xff]
    %v116 = vld [vmem:[#allocation7 + $0x10] sm:$0xff]
    %v117 = vld [vmem:[#allocation7 + $0x18] sm:$0xff]
    %v118 = vld [vmem:[%s4] sm:$0x1]
    %v120 = vperm.slane %v118, 0
    %vm122 = vcmask 261120
    %v124 = vsel %vm122, %v112, 0
    %v127 = vsel %vm122, %v113, 0
    %129 = vmatpush.msra.mxu0 0.0
    %130 = vmatpush.msra.mxu0 0.0
    %131 = vmatpush.msra.mxu0 0.0
    %132 = vmatpush.msra.mxu0 0.0
    %133 = vmatpush.msra.mxu0 0.0
    %134 = vmatpush.msra.mxu0 0.0
    %135 = vmatpush.msra.mxu0 0.0
    %136 = vmatpush.msra.mxu0 0.0
    %137 = vmatpush.msra.mxu0 0.0
    %138 = vmatpush.msra.mxu0 0.0
    %139 = vmatpush.msra.mxu0 0.0
    %140 = vmatpush.msra.mxu0 0.0
    %141 = vmatpush.msra.mxu0 %v117
    %142 = vmatpush.msra.mxu0 %v116
    %143 = vmatpush.msra.mxu0 %v115
    %144 = vmatpush.msra.mxu0 %v114
    %145 = vmatmul.f32.gmra.mxu0 %v124
    %v146 = vpop.f32.mrf.mxu0
    %v147 = vadd.f32 %v120, %v146
    %148 = vmatmul.f32.gmra.mxu0 %v127
    %v149 = vpop.f32.mrf.mxu0
    %v150 = vadd.f32 %v120, %v149
    %151 = vdwg.mxu0
    %152 = vst.msk [vmem:[#allocation8] sm:$0xff] %vm122, %v147
    %153 = vst.msk [vmem:[#allocation8 + $0x8] sm:$0xff] %vm122, %v150
    // Predicated region
    $region34: #{tpu_custom_call.1} parent=1 // pred_check
      _
    $region35: #{tpu_custom_call.1} parent=1 // pred_check_branch
      %155 = sbr.rel (0) target = $region37
    $region36: #{tpu_custom_call.1} parent=1 // pred_region
      %157 = vsyncadd [#allocation4], 0
      %s158 = sshll.u32 [#allocation8], 4
      %s159 = int_to_ptr.vmem [resolvable:$true] %s158
      %s160 = sshll.u32 %s5, 4
      %s161 = int_to_ptr.hbm [resolvable:$true] %s160
      %166 = dma.vmem_to_hbm [thread:$0]  %s159, 256, %s161, [#allocation4], 128, 128, 8
    $region37: #{tpu_custom_call.1} parent=1 // pred_fallthru
      _
    // Predicated region
    $region38: #{tpu_custom_call.1} parent=1 // pred_check
      _
    $region39: #{tpu_custom_call.1} parent=1 // pred_check_branch
      %168 = sbr.rel (0) target = $region41
    $region40: #{tpu_custom_call.1} parent=1 // pred_region
      %170 = dma.done [#allocation4], 256
    $region41: #{tpu_custom_call.1} parent=1 // pred_fallthru
      _
    %171 = vsyncpa [#allocation3], 1
    %172 = vsyncpa [#allocation6], 1
    %173 = vsyncpa [#allocation4], 1

</llo_original>
